<compile_context>
chip_gen: v7x
topology: tpu7x:2x2x1
jax: 0.10.0
libtpu: 0.0.40
codegen_flags: <defaults>
</compile_context>

<pallas_src>
import functools
import numpy as np
import jax
import jax.numpy as jnp
from jax import lax
from jax.experimental import pallas as pl
from jax.experimental.pallas import tpu as pltpu


def linear_upsample_matrix(l_in: int, scale: float) -> np.ndarray:
    """Reference-only: dense matrix for nn.Upsample(mode='linear', align_corners=False)."""
    l_out = int(np.floor(l_in * scale))
    m = np.zeros((l_in, l_out), np.float32)
    for i in range(l_out):
        src = (i + 0.5) / scale - 0.5
        src = max(src, 0.0)
        i0 = min(int(np.floor(src)), l_in - 1)
        i1 = min(i0 + 1, l_in - 1)
        lam = src - i0
        m[i0, i] += 1.0 - lam
        m[i1, i] += lam
    return m


def upconv_kernel(x_ref, w_ref, g_ref, b_ref, o_ref, *,
                  kernel_size, dilation, pool_stride, scale, eps):
    # x_ref:(bt, C_in, L) compute_dtype   w_ref:(C_out, K*C_in) compute_dtype
    # g_ref/b_ref:(C_out, 1) f32          o_ref:(bt, C_out, l_out) f32
    bt, c_in, L = x_ref.shape
    c_out = w_ref.shape[0]
    K, d, ps = kernel_size, dilation, pool_stride
    total = d * (K - 1)
    left = total // 2
    right = total - left
    l_pool = L // ps
    l_valid = l_pool * ps              # conv columns actually consumed by the pool
    l_out = l_pool * scale             # upsampled length per batch element
    seg = L + total                    # padded per-batch-element segment width
    cdt = x_ref.dtype                  # conv compute dtype (bf16 or f32)

    wmat = w_ref[...]                  # (C_out, K*C_in)
    g = g_ref[...]                     # (C_out, 1) f32
    b = b_ref[...]                     # (C_out, 1) f32

    # ---- zero-separated lane packing of the sub-batch ---------------------------
    # [left0 | x_0 | tot0 | x_1 | tot0 | ... | x_{bt-1} | right0], width = bt*seg.
    # Each batch element carries its own 'same' halo, so one conv over the packed
    # signal never mixes neighbouring batch elements on the valid output columns.
    pieces = []
    if left > 0:
        pieces.append(jnp.zeros((c_in, left), cdt))
    for bi in range(bt):
        if bi > 0 and total > 0:
            pieces.append(jnp.zeros((c_in, total), cdt))
        pieces.append(x_ref[bi])
    if right > 0:
        pieces.append(jnp.zeros((c_in, right), cdt))
    xp = pieces[0] if len(pieces) == 1 else jnp.concatenate(pieces, axis=-1)

    # ---- im2col along sublanes (K lane slices) -> ONE fused MXU matmul ----------
    wd = bt * seg - total
    if K > 1:
        xcat = jnp.concatenate([xp[:, k * d:k * d + wd] for k in range(K)], axis=0)
    else:
        xcat = xp
    y_all = jnp.dot(wmat, xcat, preferred_element_type=jnp.float32)   # (C_out, wd) f32

    # ---- keep only the valid (pool-truncated) columns of each segment -----------
    if total > 0 or l_valid < L:
        parts = [y_all[:, bi * seg:bi * seg + l_valid] for bi in range(bt)]
        y = parts[0] if len(parts) == 1 else jnp.concatenate(parts, axis=-1)
    else:
        y = y_all
    wv = bt * l_valid                                                 # lanes of y

    # ---- LayerNorm over channels (per position), centred two-pass stats ---------
    inv_c = 1.0 / c_out
    mean = jnp.sum(y, axis=0, keepdims=True) * inv_c
    yc = y - mean
    var = jnp.sum(yc * yc, axis=0, keepdims=True) * inv_c
    y = yc * lax.rsqrt(var + eps) * g + b

    # ---- exact (erf) GELU, matching torch.nn.GELU() default ---------------------
    # TODO(synk): tanh-approx GELU (EUP transcendental) if VALU-bound on v7x.
    y = 0.5 * y * (1.0 + lax.erf(y * 0.7071067811865475))

    # ---- Dropout: inference identity ---------------------------------------------
    # TODO(synk): training-mode stochastic dropout (pltpu.prng_*) not implemented.

    lane = lax.broadcasted_iota(jnp.int32, (1, wv), 1)

    if ps == scale:
        # ===== constant-lane-width fast path (no reshape relayouts) ==============
        # MaxPool1d(kernel=stride=ps) as a segmented group-max broadcast to every
        # lane of its group; lane i then holds pool[i // ps], which is exactly the
        # nearest-source expansion the linear upsample needs.
        if ps > 1:
            off = lane % ps
            pooled = y
            for o in range(1, ps):
                fwd = jnp.where(off < ps - o, jnp.roll(y, -o, axis=-1), -jnp.inf)
                bwd = jnp.where(off >= o, jnp.roll(y, o, axis=-1), -jnp.inf)
                pooled = jnp.maximum(pooled, jnp.maximum(fwd, bwd))
        else:
            pooled = y

        # Upsample(linear, align_corners=False): 2-tap blend with the neighbouring
        # pooled group, clamped at each batch element's boundary; phase weights are
        # periodic in (lane % scale), so the output comes out already interleaved.
        if scale > 1 and l_pool > 1:
            pos = lane % l_valid
            nb_r = jnp.where(pos >= l_valid - scale, pooled,
                             jnp.roll(pooled, -scale, axis=-1))
            nb_l = jnp.where(pos < scale, pooled, jnp.roll(pooled, scale, axis=-1))
            f = (lane % scale).astype(jnp.float32) * (1.0 / scale) + (0.5 / scale - 0.5)
            w_c = jnp.where(f >= 0.0, 1.0 - f, 1.0 + f)
            w_r = jnp.where(f >= 0.0, f, 0.0)
            w_l = jnp.where(f >= 0.0, 0.0, -f)
            out_all = w_c * pooled + w_r * nb_r + w_l * nb_l
        else:
            out_all = pooled
        # TODO(synk): the +/-shift copies could move to the XLU via pltpu.roll once the
        # rotation direction is verified on hardware; jnp.roll (slice+concat) is used
        # for guaranteed semantics.
    else:
        # ===== general path (pool_stride != scale) ================================
        # TODO(synk): costs one lane-split relayout (pool) + one interleave relayout.
        if ps > 1:
            pooled = jnp.max(y.reshape(c_out, bt * l_pool, ps), axis=-1)
        else:
            pooled = y
        P = bt * l_pool
        plane = lax.broadcasted_iota(jnp.int32, (1, P), 1)
        pos = plane % l_pool
        if l_pool > 1:
            nb_r = jnp.where(pos == l_pool - 1, pooled, jnp.roll(pooled, -1, axis=-1))
            nb_l = jnp.where(pos == 0, pooled, jnp.roll(pooled, 1, axis=-1))
        else:
            nb_r = pooled
            nb_l = pooled
        phases = []
        for r in range(scale):
            fr = (r + 0.5) / scale - 0.5
            if fr >= 0.0:
                phases.append((1.0 - fr) * pooled + fr * nb_r)
            else:
                phases.append((-fr) * nb_l + (1.0 + fr) * pooled)
        if scale > 1:
            out_all = jnp.stack(phases, axis=-1).reshape(c_out, P * scale)
        else:
            out_all = phases[0]

    # ---- per-batch-element lane-dense stores (full l_out lanes each) ------------
    for bi in range(bt):
        o_ref[bi] = out_all[:, bi * l_out:(bi + 1) * l_out].astype(o_ref.dtype)


def upconv_block(x, w, gamma, beta, *, kernel_size, stride, scale, dilation=1,
                 eps=1e-5, compute_dtype=jnp.bfloat16, batch_block=None,
                 vmem_budget_bytes=12 << 20):
    n, c_in, L = x.shape
    c_out = w.shape[0]
    assert w.shape == (c_out, c_in, kernel_size)
    assert float(scale) == int(scale) and int(scale) >= 1, "integer scale factors only"
    # TODO(synk): non-integer nn.Upsample scale factors are not supported.
    scale = int(scale)
    ps = int(stride)
    l_pool = L // ps
    assert l_pool >= 1, "sequence shorter than pooling stride"
    l_out = l_pool * scale
    total = dilation * (kernel_size - 1)
    seg = L + total

    # --- VMEM-budgeted sub-batch per grid step (>= 4 steps when the batch allows,
    #     so v7x's two TensorCores each get >= 2 steps and DMA overlaps compute). ---
    isz = jnp.dtype(compute_dtype).itemsize
    per_b = (2 * c_in * L * isz                        # double-buffered input block
             + (kernel_size + 1) * c_in * seg * isz    # packed input + im2col slab
             + c_out * seg * 4                         # conv output (f32)
             + 6 * c_out * l_pool * ps * 4             # LN/GELU/pool/upsample temps
             + 2 * c_out * l_out * 4)                  # double-buffered output block
    if batch_block is None:
        bt = max(1, int(vmem_budget_bytes // max(per_b, 1)))
        bt = min(bt, 32)                               # bound unrolled concat/store count
        bt = min(bt, max(1, n // 4))
    else:
        bt = int(batch_block)
    bt = max(1, min(bt, n))
    while n % bt:
        bt -= 1
    grid_n = n // bt

    # bf16 (or f32) conv operands; bf16 halves the input DMA bytes.
    x_c = x.astype(compute_dtype)
    w2 = jnp.transpose(w, (0, 2, 1)).reshape(c_out, kernel_size * c_in).astype(compute_dtype)
    g2 = gamma.reshape(c_out, 1).astype(jnp.float32)
    b2 = beta.reshape(c_out, 1).astype(jnp.float32)

    kern = functools.partial(upconv_kernel, kernel_size=kernel_size, dilation=dilation,
                             pool_stride=ps, scale=scale, eps=eps)

    vmem_limit = int(min(64 << 20, max(32 << 20, 2 * bt * per_b + (8 << 20))))

    # TODO(synk): for very long sequences add an L-tiling grid axis with a
    # dilation*(K-1) halo instead of relying on batch_block alone to bound VMEM.
    # Note: w2/g2/b2 use a constant index_map so they are re-used across steps.
    return pl.pallas_call(
        kern,
        out_shape=jax.ShapeDtypeStruct((n, c_out, l_out), jnp.float32),
        grid_spec=pltpu.PrefetchScalarGridSpec(
            num_scalar_prefetch=0,
            grid=(grid_n,),
            in_specs=[
                pl.BlockSpec((bt, c_in, L), lambda i: (i, 0, 0)),
                pl.BlockSpec((c_out, kernel_size * c_in), lambda i: (0, 0)),
                pl.BlockSpec((c_out, 1), lambda i: (0, 0)),
                pl.BlockSpec((c_out, 1), lambda i: (0, 0)),
            ],
            out_specs=pl.BlockSpec((bt, c_out, l_out), lambda i: (i, 0, 0)),
        ),
        compiler_params=pltpu.CompilerParams(
            dimension_semantics=("parallel",),
            vmem_limit_bytes=vmem_limit),
    )(x_c, w2, g2, b2)


def upconv_ref(x, w, gamma, beta, kernel_size, stride, scale, dilation=1, eps=1e-5):
    """Pure-JAX f32 reference mirroring the PyTorch forward pass."""
    n, c_in, L = x.shape
    total = dilation * (kernel_size - 1)
    left = total // 2
    xp = jnp.pad(x, ((0, 0), (0, 0), (left, total - left)))
    y = jnp.zeros((n, w.shape[0], L), jnp.float32)
    for k in range(kernel_size):
        off = k * dilation
        y = y + jnp.einsum('oc,ncl->nol', w[:, :, k], xp[:, :, off:off + L])
    mean = y.mean(axis=1, keepdims=True)
    var = ((y - mean) ** 2).mean(axis=1, keepdims=True)
    y = (y - mean) / jnp.sqrt(var + eps) * gamma[None, :, None] + beta[None, :, None]
    y = 0.5 * y * (1.0 + jax.scipy.special.erf(y / np.sqrt(2.0)))
    l_pool = L // stride
    y = y[:, :, :l_pool * stride].reshape(n, -1, l_pool, stride).max(-1)
    m = jnp.asarray(linear_upsample_matrix(l_pool, scale))
    return jnp.einsum('ncl,lo->nco', y, m)


if __name__ == "__main__":
    def check(seed, n, c_in, c_out, L, K, stride, scale, *, batch_block=None,
              compute_dtype=jnp.float32, rtol=1e-4, atol=1e-4):
        key = jax.random.fold_in(jax.random.PRNGKey(0), seed)
        k1, k2, k3, k4 = jax.random.split(key, 4)
        x = jax.random.normal(k1, (n, c_in, L), jnp.float32)
        w = 0.2 * jax.random.normal(k2, (c_out, c_in, K), jnp.float32)       # Conv1d weight
        gamma = 1.0 + 0.1 * jax.random.normal(k3, (c_out,), jnp.float32)     # LayerNorm weight
        beta = 0.1 * jax.random.normal(k4, (c_out,), jnp.float32)            # LayerNorm bias
        ref = upconv_ref(x, w, gamma, beta, K, stride, scale)
        out = jax.block_until_ready(
            upconv_block(x, w, gamma, beta, kernel_size=K, stride=stride, scale=scale,
                         batch_block=batch_block, compute_dtype=compute_dtype))
        assert out.shape == ref.shape, (out.shape, ref.shape)
        np.testing.assert_allclose(np.asarray(out), np.asarray(ref), rtol=rtol, atol=atol)

    # f32 operands, multi-element sub-batch: exercises the packed-segment im2col,
    # single fused matmul, segmented-max pool and interleaved upsample stores.
    check(0, 4, 4, 8, 16, 3, 2, 2, batch_block=2, compute_dtype=jnp.float32,
          rtol=1e-4, atol=1e-4)
    # Default heuristic block + bf16 conv operands (f32 accumulation).
    check(1, 4, 4, 8, 16, 3, 2, 2, compute_dtype=jnp.bfloat16, rtol=3e-2, atol=3e-2)
    # Even kernel (asymmetric 'same' pad), odd length (pool truncation), odd channel
    # counts, whole batch in a single grid step.
    check(2, 3, 5, 6, 19, 4, 2, 2, batch_block=3, compute_dtype=jnp.float32,
          rtol=1e-4, atol=1e-4)

    print("KERNEL_OK")
</pallas_src>

<mosaic_0001>
module attributes {stable_mosaic.version = 11 : i64} {
  func.func @upconv_kernel(%arg0: i32, %arg1: memref<2x4x16xf32, #tpu.memory_space<vmem>>, %arg2: memref<8x12xf32, #tpu.memory_space<vmem>>, %arg3: memref<8x1xf32, #tpu.memory_space<vmem>>, %arg4: memref<8x1xf32, #tpu.memory_space<vmem>>, %arg5: memref<2x8x16xf32, #tpu.memory_space<vmem>>) attributes {dimension_semantics = [#tpu.dimension_semantics<parallel>], iteration_bounds = array<i64: 2>, scalar_prefetch = 0 : i64, scratch_operands = 0 : i64, tpu.core_type = #tpu.core_type<tc>, window_params = [{transform_indices = @transform_0, window_bounds = array<i64: 2, 4, 16>}, {pipeline_mode = #tpu.pipeline_mode<synchronous>, transform_indices = @transform_1, window_bounds = array<i64: 8, 12>}, {pipeline_mode = #tpu.pipeline_mode<synchronous>, transform_indices = @transform_2, window_bounds = array<i64: 8, 1>}, {pipeline_mode = #tpu.pipeline_mode<synchronous>, transform_indices = @transform_3, window_bounds = array<i64: 8, 1>}, {transform_indices = @transform_4, window_bounds = array<i64: 2, 8, 16>}]} {
    %c0 = arith.constant 0 : index
    %c0_0 = arith.constant 0 : index
    %0 = vector.load %arg2[%c0, %c0_0] : memref<8x12xf32, #tpu.memory_space<vmem>>, vector<8x12xf32>
    %c0_1 = arith.constant 0 : index
    %c0_2 = arith.constant 0 : index
    %1 = vector.load %arg3[%c0_1, %c0_2] : memref<8x1xf32, #tpu.memory_space<vmem>>, vector<8x1xf32>
    %c0_3 = arith.constant 0 : index
    %c0_4 = arith.constant 0 : index
    %2 = vector.load %arg4[%c0_3, %c0_4] : memref<8x1xf32, #tpu.memory_space<vmem>>, vector<8x1xf32>
    %cst = arith.constant 0.000000e+00 : f32
    %3 = vector.broadcast %cst : f32 to vector<4x1xf32>
    %c0_5 = arith.constant 0 : index
    %c0_6 = arith.constant 0 : index
    %c0_7 = arith.constant 0 : index
    %4 = vector.load %arg1[%c0_5, %c0_6, %c0_7] : memref<2x4x16xf32, #tpu.memory_space<vmem>>, vector<1x4x16xf32>
    %5 = vector.shape_cast %4 : vector<1x4x16xf32> to vector<4x16xf32>
    %cst_8 = arith.constant 0.000000e+00 : f32
    %6 = vector.broadcast %cst_8 : f32 to vector<4x2xf32>
    %c1 = arith.constant 1 : index
    %c0_9 = arith.constant 0 : index
    %c0_10 = arith.constant 0 : index
    %7 = vector.load %arg1[%c1, %c0_9, %c0_10] : memref<2x4x16xf32, #tpu.memory_space<vmem>>, vector<1x4x16xf32>
    %8 = vector.shape_cast %7 : vector<1x4x16xf32> to vector<4x16xf32>
    %cst_11 = arith.constant 0.000000e+00 : f32
    %9 = vector.broadcast %cst_11 : f32 to vector<4x1xf32>
    %10 = tpu.concatenate %3, %5, %6, %8, %9 in 1 : vector<4x1xf32>, vector<4x16xf32>, vector<4x2xf32>, vector<4x16xf32>, vector<4x1xf32> -> vector<4x36xf32>
    %11 = vector.extract_strided_slice %10 {offsets = [0, 0], sizes = [4, 34], strides = [1, 1]} : vector<4x36xf32> to vector<4x34xf32>
    %12 = vector.extract_strided_slice %10 {offsets = [0, 1], sizes = [4, 34], strides = [1, 1]} : vector<4x36xf32> to vector<4x34xf32>
    %13 = vector.extract_strided_slice %10 {offsets = [0, 2], sizes = [4, 34], strides = [1, 1]} : vector<4x36xf32> to vector<4x34xf32>
    %14 = tpu.concatenate %11, %12, %13 in 0 : vector<4x34xf32>, vector<4x34xf32>, vector<4x34xf32> -> vector<12x34xf32>
    %cst_12 = arith.constant dense<0.000000e+00> : vector<8x34xf32>
    %15 = tpu.matmul %0, %14, %cst_12 {dimension_numbers = #tpu.dot_dimension_numbers<[1], [0], [0], [1], [0, 0, 1, 1], [], []>} : vector<8x12xf32>, vector<12x34xf32>, vector<8x34xf32> -> vector<8x34xf32>
    %16 = vector.extract_strided_slice %15 {offsets = [0, 0], sizes = [8, 16], strides = [1, 1]} : vector<8x34xf32> to vector<8x16xf32>
    %17 = vector.extract_strided_slice %15 {offsets = [0, 18], sizes = [8, 16], strides = [1, 1]} : vector<8x34xf32> to vector<8x16xf32>
    %18 = tpu.concatenate %16, %17 in 1 : vector<8x16xf32>, vector<8x16xf32> -> vector<8x32xf32>
    %cst_13 = arith.constant dense<0.000000e+00> : vector<32xf32>
    %19 = vector.multi_reduction <add>, %18, %cst_13 [0] : vector<8x32xf32> to vector<32xf32>
    %20 = vector.shape_cast %19 : vector<32xf32> to vector<1x32xf32>
    %cst_14 = arith.constant 1.250000e-01 : f32
    %21 = vector.broadcast %cst_14 : f32 to vector<1x32xf32>
    %22 = arith.mulf %20, %21 : vector<1x32xf32>
    %23 = vector.broadcast %22 : vector<1x32xf32> to vector<8x32xf32>
    %24 = arith.subf %18, %23 : vector<8x32xf32>
    %25 = arith.mulf %24, %24 : vector<8x32xf32>
    %cst_15 = arith.constant dense<0.000000e+00> : vector<32xf32>
    %26 = vector.multi_reduction <add>, %25, %cst_15 [0] : vector<8x32xf32> to vector<32xf32>
    %27 = vector.shape_cast %26 : vector<32xf32> to vector<1x32xf32>
    %cst_16 = arith.constant 1.250000e-01 : f32
    %28 = vector.broadcast %cst_16 : f32 to vector<1x32xf32>
    %29 = arith.mulf %27, %28 : vector<1x32xf32>
    %cst_17 = arith.constant 9.99999974E-6 : f32
    %30 = vector.broadcast %cst_17 : f32 to vector<1x32xf32>
    %31 = arith.addf %29, %30 : vector<1x32xf32>
    %32 = math.rsqrt %31 : vector<1x32xf32>
    %33 = vector.broadcast %32 : vector<1x32xf32> to vector<8x32xf32>
    %34 = arith.mulf %24, %33 : vector<8x32xf32>
    %35 = vector.broadcast %1 : vector<8x1xf32> to vector<8x32xf32>
    %36 = arith.mulf %34, %35 : vector<8x32xf32>
    %37 = vector.broadcast %2 : vector<8x1xf32> to vector<8x32xf32>
    %38 = arith.addf %36, %37 : vector<8x32xf32>
    %cst_18 = arith.constant 5.000000e-01 : f32
    %39 = vector.broadcast %cst_18 : f32 to vector<8x32xf32>
    %40 = arith.mulf %39, %38 : vector<8x32xf32>
    %cst_19 = arith.constant 0.707106769 : f32
    %41 = vector.broadcast %cst_19 : f32 to vector<8x32xf32>
    %42 = arith.mulf %38, %41 : vector<8x32xf32>
    %43 = math.erf %42 : vector<8x32xf32>
    %cst_20 = arith.constant 1.000000e+00 : f32
    %44 = vector.broadcast %cst_20 : f32 to vector<8x32xf32>
    %45 = arith.addf %44, %43 : vector<8x32xf32>
    %46 = arith.mulf %40, %45 : vector<8x32xf32>
    %47 = tpu.iota {dimensions = array<i32: 1>} : vector<1x32xi32>
    %c2_i32 = arith.constant 2 : i32
    %c0_i32 = arith.constant 0 : i32
    %48 = arith.cmpi eq, %c2_i32, %c0_i32 : i32
    %c1_i32 = arith.constant 1 : i32
    %49 = arith.select %48, %c1_i32, %c2_i32 : i32
    %50 = vector.broadcast %49 : i32 to vector<1x32xi32>
    %51 = arith.remsi %47, %50 : vector<1x32xi32>
    %c0_i32_21 = arith.constant 0 : i32
    %52 = vector.broadcast %c0_i32_21 : i32 to vector<1x32xi32>
    %53 = arith.cmpi ne, %51, %52 : vector<1x32xi32>
    %c0_i32_22 = arith.constant 0 : i32
    %54 = vector.broadcast %c0_i32_22 : i32 to vector<1x32xi32>
    %55 = arith.cmpi slt, %51, %54 : vector<1x32xi32>
    %c0_i32_23 = arith.constant 0 : i32
    %56 = arith.cmpi slt, %49, %c0_i32_23 : i32
    %57 = vector.broadcast %56 : i1 to vector<1x32xi1>
    %58 = vector.broadcast %57 : vector<1x32xi1> to vector<1x32xi1>
    %59 = arith.xori %55, %58 : vector<1x32xi1>
    %60 = arith.andi %59, %53 : vector<1x32xi1>
    %61 = vector.broadcast %49 : i32 to vector<1x32xi32>
    %62 = arith.addi %51, %61 : vector<1x32xi32>
    %63 = arith.select %60, %62, %51 : vector<1x32xi1>, vector<1x32xi32>
    %c1_i32_24 = arith.constant 1 : i32
    %64 = vector.broadcast %c1_i32_24 : i32 to vector<1x32xi32>
    %65 = arith.cmpi slt, %63, %64 : vector<1x32xi32>
    %66 = vector.extract_strided_slice %46 {offsets = [0, 1], sizes = [8, 31], strides = [1, 1]} : vector<8x32xf32> to vector<8x31xf32>
    %67 = vector.extract_strided_slice %46 {offsets = [0, 0], sizes = [8, 1], strides = [1, 1]} : vector<8x32xf32> to vector<8x1xf32>
    %68 = tpu.concatenate %66, %67 in 1 : vector<8x31xf32>, vector<8x1xf32> -> vector<8x32xf32>
    %cst_25 = arith.constant 0xFF800000 : f32
    %69 = vector.shape_cast %65 : vector<1x32xi1> to vector<1x32xi1>
    %70 = vector.broadcast %69 : vector<1x32xi1> to vector<8x32xi1>
    %71 = vector.broadcast %cst_25 : f32 to vector<8x32xf32>
    %72 = arith.select %70, %68, %71 : vector<8x32xi1>, vector<8x32xf32>
    %c1_i32_26 = arith.constant 1 : i32
    %73 = vector.broadcast %c1_i32_26 : i32 to vector<1x32xi32>
    %74 = arith.cmpi sge, %63, %73 : vector<1x32xi32>
    %75 = vector.extract_strided_slice %46 {offsets = [0, 31], sizes = [8, 1], strides = [1, 1]} : vector<8x32xf32> to vector<8x1xf32>
    %76 = vector.extract_strided_slice %46 {offsets = [0, 0], sizes = [8, 31], strides = [1, 1]} : vector<8x32xf32> to vector<8x31xf32>
    %77 = tpu.concatenate %75, %76 in 1 : vector<8x1xf32>, vector<8x31xf32> -> vector<8x32xf32>
    %cst_27 = arith.constant 0xFF800000 : f32
    %78 = vector.shape_cast %74 : vector<1x32xi1> to vector<1x32xi1>
    %79 = vector.broadcast %78 : vector<1x32xi1> to vector<8x32xi1>
    %80 = vector.broadcast %cst_27 : f32 to vector<8x32xf32>
    %81 = arith.select %79, %77, %80 : vector<8x32xi1>, vector<8x32xf32>
    %82 = arith.maximumf %72, %81 : vector<8x32xf32>
    %83 = arith.maximumf %46, %82 : vector<8x32xf32>
    %c16_i32 = arith.constant 16 : i32
    %c0_i32_28 = arith.constant 0 : i32
    %84 = arith.cmpi eq, %c16_i32, %c0_i32_28 : i32
    %c1_i32_29 = arith.constant 1 : i32
    %85 = arith.select %84, %c1_i32_29, %c16_i32 : i32
    %86 = vector.broadcast %85 : i32 to vector<1x32xi32>
    %87 = arith.remsi %47, %86 : vector<1x32xi32>
    %c0_i32_30 = arith.constant 0 : i32
    %88 = vector.broadcast %c0_i32_30 : i32 to vector<1x32xi32>
    %89 = arith.cmpi ne, %87, %88 : vector<1x32xi32>
    %c0_i32_31 = arith.constant 0 : i32
    %90 = vector.broadcast %c0_i32_31 : i32 to vector<1x32xi32>
    %91 = arith.cmpi slt, %87, %90 : vector<1x32xi32>
    %c0_i32_32 = arith.constant 0 : i32
    %92 = arith.cmpi slt, %85, %c0_i32_32 : i32
    %93 = vector.broadcast %92 : i1 to vector<1x32xi1>
    %94 = vector.broadcast %93 : vector<1x32xi1> to vector<1x32xi1>
    %95 = arith.xori %91, %94 : vector<1x32xi1>
    %96 = arith.andi %95, %89 : vector<1x32xi1>
    %97 = vector.broadcast %85 : i32 to vector<1x32xi32>
    %98 = arith.addi %87, %97 : vector<1x32xi32>
    %99 = arith.select %96, %98, %87 : vector<1x32xi1>, vector<1x32xi32>
    %c14_i32 = arith.constant 14 : i32
    %100 = vector.broadcast %c14_i32 : i32 to vector<1x32xi32>
    %101 = arith.cmpi sge, %99, %100 : vector<1x32xi32>
    %102 = vector.extract_strided_slice %83 {offsets = [0, 2], sizes = [8, 30], strides = [1, 1]} : vector<8x32xf32> to vector<8x30xf32>
    %103 = vector.extract_strided_slice %83 {offsets = [0, 0], sizes = [8, 2], strides = [1, 1]} : vector<8x32xf32> to vector<8x2xf32>
    %104 = tpu.concatenate %102, %103 in 1 : vector<8x30xf32>, vector<8x2xf32> -> vector<8x32xf32>
    %105 = vector.shape_cast %101 : vector<1x32xi1> to vector<1x32xi1>
    %106 = vector.broadcast %105 : vector<1x32xi1> to vector<8x32xi1>
    %107 = arith.select %106, %83, %104 : vector<8x32xi1>, vector<8x32xf32>
    %c2_i32_33 = arith.constant 2 : i32
    %108 = vector.broadcast %c2_i32_33 : i32 to vector<1x32xi32>
    %109 = arith.cmpi slt, %99, %108 : vector<1x32xi32>
    %110 = vector.extract_strided_slice %83 {offsets = [0, 30], sizes = [8, 2], strides = [1, 1]} : vector<8x32xf32> to vector<8x2xf32>
    %111 = vector.extract_strided_slice %83 {offsets = [0, 0], sizes = [8, 30], strides = [1, 1]} : vector<8x32xf32> to vector<8x30xf32>
    %112 = tpu.concatenate %110, %111 in 1 : vector<8x2xf32>, vector<8x30xf32> -> vector<8x32xf32>
    %113 = vector.shape_cast %109 : vector<1x32xi1> to vector<1x32xi1>
    %114 = vector.broadcast %113 : vector<1x32xi1> to vector<8x32xi1>
    %115 = arith.select %114, %83, %112 : vector<8x32xi1>, vector<8x32xf32>
    %c2_i32_34 = arith.constant 2 : i32
    %c0_i32_35 = arith.constant 0 : i32
    %116 = arith.cmpi eq, %c2_i32_34, %c0_i32_35 : i32
    %c1_i32_36 = arith.constant 1 : i32
    %117 = arith.select %116, %c1_i32_36, %c2_i32_34 : i32
    %118 = vector.broadcast %117 : i32 to vector<1x32xi32>
    %119 = arith.remsi %47, %118 : vector<1x32xi32>
    %c0_i32_37 = arith.constant 0 : i32
    %120 = vector.broadcast %c0_i32_37 : i32 to vector<1x32xi32>
    %121 = arith.cmpi ne, %119, %120 : vector<1x32xi32>
    %c0_i32_38 = arith.constant 0 : i32
    %122 = vector.broadcast %c0_i32_38 : i32 to vector<1x32xi32>
    %123 = arith.cmpi slt, %119, %122 : vector<1x32xi32>
    %c0_i32_39 = arith.constant 0 : i32
    %124 = arith.cmpi slt, %117, %c0_i32_39 : i32
    %125 = vector.broadcast %124 : i1 to vector<1x32xi1>
    %126 = vector.broadcast %125 : vector<1x32xi1> to vector<1x32xi1>
    %127 = arith.xori %123, %126 : vector<1x32xi1>
    %128 = arith.andi %127, %121 : vector<1x32xi1>
    %129 = vector.broadcast %117 : i32 to vector<1x32xi32>
    %130 = arith.addi %119, %129 : vector<1x32xi32>
    %131 = arith.select %128, %130, %119 : vector<1x32xi1>, vector<1x32xi32>
    %132 = arith.sitofp %131 : vector<1x32xi32> to vector<1x32xf32>
    %cst_40 = arith.constant 5.000000e-01 : f32
    %133 = vector.broadcast %cst_40 : f32 to vector<1x32xf32>
    %134 = arith.mulf %132, %133 : vector<1x32xf32>
    %cst_41 = arith.constant -2.500000e-01 : f32
    %135 = vector.broadcast %cst_41 : f32 to vector<1x32xf32>
    %136 = arith.addf %134, %135 : vector<1x32xf32>
    %cst_42 = arith.constant 0.000000e+00 : f32
    %137 = vector.broadcast %cst_42 : f32 to vector<1x32xf32>
    %138 = arith.cmpf oge, %136, %137 : vector<1x32xf32>
    %cst_43 = arith.constant 1.000000e+00 : f32
    %139 = vector.broadcast %cst_43 : f32 to vector<1x32xf32>
    %140 = arith.subf %139, %136 : vector<1x32xf32>
    %cst_44 = arith.constant 1.000000e+00 : f32
    %141 = vector.broadcast %cst_44 : f32 to vector<1x32xf32>
    %142 = arith.addf %141, %136 : vector<1x32xf32>
    %143 = arith.select %138, %140, %142 : vector<1x32xi1>, vector<1x32xf32>
    %cst_45 = arith.constant 0.000000e+00 : f32
    %144 = vector.broadcast %cst_45 : f32 to vector<1x32xf32>
    %145 = arith.cmpf oge, %136, %144 : vector<1x32xf32>
    %cst_46 = arith.constant 0.000000e+00 : f32
    %146 = vector.broadcast %cst_46 : f32 to vector<1x32xf32>
    %147 = arith.select %145, %136, %146 : vector<1x32xi1>, vector<1x32xf32>
    %cst_47 = arith.constant 0.000000e+00 : f32
    %148 = vector.broadcast %cst_47 : f32 to vector<1x32xf32>
    %149 = arith.cmpf oge, %136, %148 : vector<1x32xf32>
    %cst_48 = arith.constant 0.000000e+00 : f32
    %150 = vector.broadcast %cst_48 : f32 to vector<1x32xf32>
    %151 = arith.subf %150, %136 : vector<1x32xf32>
    %cst_49 = arith.constant 0.000000e+00 : f32
    %152 = vector.broadcast %cst_49 : f32 to vector<1x32xf32>
    %153 = arith.select %149, %152, %151 : vector<1x32xi1>, vector<1x32xf32>
    %154 = vector.broadcast %143 : vector<1x32xf32> to vector<8x32xf32>
    %155 = arith.mulf %154, %83 : vector<8x32xf32>
    %156 = vector.broadcast %147 : vector<1x32xf32> to vector<8x32xf32>
    %157 = arith.mulf %156, %107 : vector<8x32xf32>
    %158 = arith.addf %155, %157 : vector<8x32xf32>
    %159 = vector.broadcast %153 : vector<1x32xf32> to vector<8x32xf32>
    %160 = arith.mulf %159, %115 : vector<8x32xf32>
    %161 = arith.addf %158, %160 : vector<8x32xf32>
    %162 = vector.extract_strided_slice %161 {offsets = [0, 0], sizes = [8, 16], strides = [1, 1]} : vector<8x32xf32> to vector<8x16xf32>
    %c0_50 = arith.constant 0 : index
    %c0_51 = arith.constant 0 : index
    %c0_52 = arith.constant 0 : index
    %163 = vector.load %arg5[%c0_50, %c0_51, %c0_52] : memref<2x8x16xf32, #tpu.memory_space<vmem>>, vector<1x8x16xf32>
    %164 = vector.shape_cast %163 : vector<1x8x16xf32> to vector<8x16xf32>
    %165 = vector.shape_cast %162 : vector<8x16xf32> to vector<1x8x16xf32>
    tpu.vector_store %arg5[%c0_50, %c0_51, %c0_52], %165 {strides = array<i32>} : memref<2x8x16xf32, #tpu.memory_space<vmem>>, vector<1x8x16xf32>,
    %166 = vector.extract_strided_slice %161 {offsets = [0, 16], sizes = [8, 16], strides = [1, 1]} : vector<8x32xf32> to vector<8x16xf32>
    %c1_53 = arith.constant 1 : index
    %c0_54 = arith.constant 0 : index
    %c0_55 = arith.constant 0 : index
    %167 = vector.load %arg5[%c1_53, %c0_54, %c0_55] : memref<2x8x16xf32, #tpu.memory_space<vmem>>, vector<1x8x16xf32>
    %168 = vector.shape_cast %167 : vector<1x8x16xf32> to vector<8x16xf32>
    %169 = vector.shape_cast %166 : vector<8x16xf32> to vector<1x8x16xf32>
    tpu.vector_store %arg5[%c1_53, %c0_54, %c0_55], %169 {strides = array<i32>} : memref<2x8x16xf32, #tpu.memory_space<vmem>>, vector<1x8x16xf32>,
    return
  }
  func.func @transform_0(%arg0: i32) -> (i32, i32, i32) {
    %c0_i32 = arith.constant 0 : i32
    %c0_i32_0 = arith.constant 0 : i32
    %c0_i32_1 = arith.constant 0 : i32
    return %arg0, %c0_i32, %c0_i32_0 : i32, i32, i32
  }
  func.func @transform_1(%arg0: i32) -> (i32, i32) {
    %c0_i32 = arith.constant 0 : i32
    %c0_i32_0 = arith.constant 0 : i32
    %c0_i32_1 = arith.constant 0 : i32
    return %c0_i32, %c0_i32_0 : i32, i32
  }
  func.func @transform_2(%arg0: i32) -> (i32, i32) {
    %c0_i32 = arith.constant 0 : i32
    %c0_i32_0 = arith.constant 0 : i32
    %c0_i32_1 = arith.constant 0 : i32
    return %c0_i32, %c0_i32_0 : i32, i32
  }
  func.func @transform_3(%arg0: i32) -> (i32, i32) {
    %c0_i32 = arith.constant 0 : i32
    %c0_i32_0 = arith.constant 0 : i32
    %c0_i32_1 = arith.constant 0 : i32
    return %c0_i32, %c0_i32_0 : i32, i32
  }
  func.func @transform_4(%arg0: i32) -> (i32, i32, i32) {
    %c0_i32 = arith.constant 0 : i32
    %c0_i32_0 = arith.constant 0 : i32
    %c0_i32_1 = arith.constant 0 : i32
    return %arg0, %c0_i32, %c0_i32_0 : i32, i32, i32
  }
}

</mosaic_0001>

<llo_original>
// kernel: tpu_custom_call.1
$region0: #{tpu_custom_call.1}
  #allocation0 [shape = 'u32[]', space=smem, size = 0x4, offset = 0x4, fixed_abs, tag = 'smem constant byte address 0x4 - core index']
  #allocation1 [shape = 'u32[144,128]{1,0:T(1,128)}', space=vmem, size = 0x12000, scoped, tag = 'internal scratch']
  %s0 = inlined_call_operand.vmem [shape: f32[4,4,16], index: 0, kind: input, shape index: {}]
  %s1 = inlined_call_operand.hbm [shape: f32[8,12], index: 1, kind: input, shape index: {}]
  %s2 = inlined_call_operand.vmem [shape: f32[8,1], index: 2, kind: input, shape index: {}]
  %s3 = inlined_call_operand.vmem [shape: f32[8,1], index: 3, kind: input, shape index: {}]
  %s4 = inlined_call_operand.hbm [shape: f32[4,8,16], index: 4, kind: output, shape index: {}]
  %s5 = sld [smem:[#allocation0]]
  $region53: #{tpu_custom_call.1} parent=0
    _
  %s7 = ssub.s32 1, %s5
  %s8 = scalar_select 0, %s7, %s5
  $region1: #{tpu_custom_call.1} parent=0
    #allocation2 [shape = 'u8[4096]{0}', space=vmem, size = 0x1000, scoped, tag = 'input window, operand 1, single buffered']
    #allocation3 [shape = 's32[2]{0}', space=sflag, size = 0x8, scoped, tag = 'scoped memory for tpu_custom_call.1']
    #allocation4 [shape = 's32[2]{0}', space=sflag, size = 0x8, scoped, tag = 'scoped memory for tpu_custom_call.1']
    #allocation5 [shape = 'u8[16384]{0}', space=vmem, size = 0x4000, scoped, tag = 'output window, operand 0']
    %9 = vsyncpa [#allocation3], 0
    %10 = vsyncpa [#allocation4], 0
    %s11 = scalar_lea.sflag [#allocation4], 1
    %12 = vsyncpa %s11, 0
    loop: start=0, step=1, limit=4
    $region2: #{tpu_custom_call.1} parent=1 // loop_pre_header
      _
    $region3: #{tpu_custom_call.1} parent=1 // loop_header
      %s14 = sphi 0, %s18
      %p15 = scmp.ge.s32.totalorder %s14, 4
      %s24 = sphi 0, %s26
      %s27 = sphi 0, %s24
      %s28 = sphi 0, %s27
      %s44 = sphi 0, %s28
      %s48 = sphi 0, %s48
      %s50 = sphi 0, %s48
      %s51 = sphi 0, %s50
      %s65 = sphi 0, %s51
      %s69 = sphi 0, %s69
      %s71 = sphi 0, %s69
      %s72 = sphi 0, %s71
      %s86 = sphi 0, %s72
      %s90 = sphi 0, %s90
      %s92 = sphi 0, %s90
      %s93 = sphi 0, %s92
      %s107 = sphi 0, %s93
      %s113 = sphi 0, %s115
      %s116 = sphi 0, %s113
      %s117 = sphi 0, %s116
      %s133 = sphi 0, %s117
    $region4: #{tpu_custom_call.1} parent=1 // loop_header_branch
      %17 = sbr.rel (%p15) target = $region8
    $region5: #{tpu_custom_call.1} parent=1 // loop_body
      %s19 = ssub.s32 %s14, 1
      %s20 = ssub.s32 %s14, 2
      %s21 = sadd.s32 %s14, 1
      %s22 = ssub.s32 %s14, %s21
      %p23 = scmp.eq.s32.totalorder %s22, 0
      %s25 = sadd.s32 %s24, 1
      %s26 = scalar_select %p23, %s24, %s25
      %p29 = pneg %p23
      %p30 = scmp.eq.s32.totalorder %s14, 1
      %p31 = por %p29, %p30
      %p32 = scmp.ne.s32.totalorder %s24, %s27
      %p33 = scmp.eq.s32.totalorder %s14, 0
      %p34 = por %p32, %p33
      %p35 = scmp.ne.s32.totalorder %s24, %s27
      %p36 = scmp.eq.s32.totalorder %s19, 1
      %p37 = por %p35, %p36
      %p38 = scmp.ne.s32.totalorder %s27, %s28
      %p39 = scmp.eq.s32.totalorder %s19, 0
      %p40 = por %p38, %p39
      %p41 = scmp.ne.s32.totalorder %s27, %s28
      %p42 = scmp.eq.s32.totalorder %s20, 1
      %p43 = por %p41, %p42
      %p45 = scmp.ne.s32.totalorder %s28, %s44
      %p46 = scmp.eq.s32.totalorder %s20, 0
      %p47 = por %p45, %p46
      %s49 = sadd.s32 %s48, 1
      %p52 = scmp.eq.s32.totalorder %s14, 1
      %p53 = scmp.ne.s32.totalorder %s48, %s50
      %p54 = scmp.eq.s32.totalorder %s14, 0
      %p55 = por %p53, %p54
      %p56 = scmp.ne.s32.totalorder %s48, %s50
      %p57 = scmp.eq.s32.totalorder %s19, 1
      %p58 = por %p56, %p57
      %p59 = scmp.ne.s32.totalorder %s50, %s51
      %p60 = scmp.eq.s32.totalorder %s19, 0
      %p61 = por %p59, %p60
      %p62 = scmp.ne.s32.totalorder %s50, %s51
      %p63 = scmp.eq.s32.totalorder %s20, 1
      %p64 = por %p62, %p63
      %p66 = scmp.ne.s32.totalorder %s51, %s65
      %p67 = scmp.eq.s32.totalorder %s20, 0
      %p68 = por %p66, %p67
      %s70 = sadd.s32 %s69, 1
      %p73 = scmp.eq.s32.totalorder %s14, 1
      %p74 = scmp.ne.s32.totalorder %s69, %s71
      %p75 = scmp.eq.s32.totalorder %s14, 0
      %p76 = por %p74, %p75
      %p77 = scmp.ne.s32.totalorder %s69, %s71
      %p78 = scmp.eq.s32.totalorder %s19, 1
      %p79 = por %p77, %p78
      %p80 = scmp.ne.s32.totalorder %s71, %s72
      %p81 = scmp.eq.s32.totalorder %s19, 0
      %p82 = por %p80, %p81
      %p83 = scmp.ne.s32.totalorder %s71, %s72
      %p84 = scmp.eq.s32.totalorder %s20, 1
      %p85 = por %p83, %p84
      %p87 = scmp.ne.s32.totalorder %s72, %s86
      %p88 = scmp.eq.s32.totalorder %s20, 0
      %p89 = por %p87, %p88
      %s91 = sadd.s32 %s90, 1
      %p94 = scmp.eq.s32.totalorder %s14, 1
      %p95 = scmp.ne.s32.totalorder %s90, %s92
      %p96 = scmp.eq.s32.totalorder %s14, 0
      %p97 = por %p95, %p96
      %p98 = scmp.ne.s32.totalorder %s90, %s92
      %p99 = scmp.eq.s32.totalorder %s19, 1
      %p100 = por %p98, %p99
      %p101 = scmp.ne.s32.totalorder %s92, %s93
      %p102 = scmp.eq.s32.totalorder %s19, 0
      %p103 = por %p101, %p102
      %p104 = scmp.ne.s32.totalorder %s92, %s93
      %p105 = scmp.eq.s32.totalorder %s20, 1
      %p106 = por %p104, %p105
      %p108 = scmp.ne.s32.totalorder %s93, %s107
      %p109 = scmp.eq.s32.totalorder %s20, 0
      %p110 = por %p108, %p109
      %s111 = ssub.s32 %s14, %s21
      %p112 = scmp.eq.s32.totalorder %s111, 0
      %s114 = sadd.s32 %s113, 1
      %s115 = scalar_select %p112, %s113, %s114
      %p118 = pneg %p112
      %p119 = scmp.eq.s32.totalorder %s14, 1
      %p120 = por %p118, %p119
      %p121 = scmp.ne.s32.totalorder %s113, %s116
      %p122 = scmp.eq.s32.totalorder %s14, 0
      %p123 = por %p121, %p122
      %p124 = scmp.ne.s32.totalorder %s113, %s116
      %p125 = scmp.eq.s32.totalorder %s19, 1
      %p126 = por %p124, %p125
      %p127 = scmp.ne.s32.totalorder %s116, %s117
      %p128 = scmp.eq.s32.totalorder %s19, 0
      %p129 = por %p127, %p128
      %p130 = scmp.ne.s32.totalorder %s116, %s117
      %p131 = scmp.eq.s32.totalorder %s20, 1
      %p132 = por %p130, %p131
      %p134 = scmp.ne.s32.totalorder %s117, %s133
      %p135 = scmp.eq.s32.totalorder %s20, 0
      %p136 = por %p134, %p135
      %p137 = scmp.le.s32.totalorder 1, %s14
      %p138 = scmp.lt.s32.totalorder %s14, 3
      %p139 = pnand %p137, %p138
      %p140 = pneg %p139
      // Predicated region
      $region9: #{tpu_custom_call.1} parent=5 // pred_check
        _
      $region10: #{tpu_custom_call.1} parent=5 // pred_check_branch
        %142 = sbr.rel (%p139) target = $region12
      $region11: #{tpu_custom_call.1} parent=5 // pred_region
        %s143 = ssub.s32 %s14, 1
        // Predicated region
        $region13: #{tpu_custom_call.1} parent=11 // pred_check
          %p144 = pneg %p61
        $region14: #{tpu_custom_call.1} parent=11 // pred_check_branch
          %146 = sbr.rel (%p144) target = $region16
        $region15: #{tpu_custom_call.1} parent=11 // pred_region
          %s148 = ssub.s32 128, 128
          %149 = vsyncadd [#allocation3], %s148
          %s151 = sshll.u32 [#allocation2], 4
          %s152 = int_to_ptr.vmem [resolvable:$true] %s151
          %154 = dma.hbm_to_vmem [thread:$0]  %s1, 128, %s152, [#allocation3]
        $region16: #{tpu_custom_call.1} parent=11 // pred_fallthru
          _
        // Predicated region
        $region17: #{tpu_custom_call.1} parent=11 // pred_check
          %p155 = pneg %p82
        $region18: #{tpu_custom_call.1} parent=11 // pred_check_branch
          %157 = sbr.rel (%p155) target = $region20
        $region19: #{tpu_custom_call.1} parent=11 // pred_region
          _
        $region20: #{tpu_custom_call.1} parent=11 // pred_fallthru
          _
        // Predicated region
        $region21: #{tpu_custom_call.1} parent=11 // pred_check
          %p158 = pneg %p103
        $region22: #{tpu_custom_call.1} parent=11 // pred_check_branch
          %160 = sbr.rel (%p158) target = $region24
        $region23: #{tpu_custom_call.1} parent=11 // pred_region
          _
        $region24: #{tpu_custom_call.1} parent=11 // pred_fallthru
          _
      $region12: #{tpu_custom_call.1} parent=5 // pred_fallthru
        _
      %p161 = scmp.lt.s32.totalorder %s14, 2
      // Predicated region
      $region25: #{tpu_custom_call.1} parent=5 // pred_check
        %p162 = pneg %p161
      $region26: #{tpu_custom_call.1} parent=5 // pred_check_branch
        %164 = sbr.rel (%p162) target = $region28
      $region27: #{tpu_custom_call.1} parent=5 // pred_region
        // Predicated region
        $region29: #{tpu_custom_call.1} parent=27 // pred_check
          %p165 = pneg %p34
        $region30: #{tpu_custom_call.1} parent=27 // pred_check_branch
          %167 = sbr.rel (%p165) target = $region32
        $region31: #{tpu_custom_call.1} parent=27 // pred_region
          %s168 = smul.u32 2, %s14
          %p169 = scmp.lt.s32.totalorder %s168, 3
          %s170 = scalar_select %p169, %s168, 3
          %s171 = smul.addr %s170, 4
          %s172 = scalar_lea.vmem %s0, %s171
          %s173 = smul.u32 2, %s14
        $region32: #{tpu_custom_call.1} parent=27 // pred_fallthru
          _
      $region28: #{tpu_custom_call.1} parent=5 // pred_fallthru
        _
      %p174 = scmp.le.s32.totalorder 1, %s14
      %p175 = scmp.lt.s32.totalorder %s14, 3
      %p176 = pnand %p174, %p175
      %p177 = pneg %p176
      // Predicated region
      $region33: #{tpu_custom_call.1} parent=5 // pred_check
        _
      $region34: #{tpu_custom_call.1} parent=5 // pred_check_branch
        %179 = sbr.rel (%p176) target = $region36
      $region35: #{tpu_custom_call.1} parent=5 // pred_region
        %s180 = ssub.s32 %s14, 1
        // Predicated region
        $region37: #{tpu_custom_call.1} parent=35 // pred_check
          %p181 = pneg %p61
        $region38: #{tpu_custom_call.1} parent=35 // pred_check_branch
          %183 = sbr.rel (%p181) target = $region40
        $region39: #{tpu_custom_call.1} parent=35 // pred_region
          %184 = dma.done [#allocation3], 128
        $region40: #{tpu_custom_call.1} parent=35 // pred_fallthru
          _
        %s185 = smul.u32 2, %s19
        %p186 = scmp.lt.s32.totalorder %s185, 3
        %s187 = scalar_select %p186, %s185, 3
        %s188 = smul.addr %s187, 4
        %s189 = scalar_lea.vmem %s0, %s188
        %p190 = pneg %p40
        %p191 = pneg %p37
        %p192 = pneg %p61
        %p193 = pneg %p58
        %p194 = pneg %p82
        %p195 = pneg %p79
        %p196 = pneg %p103
        %p197 = pneg %p100
        %p198 = pneg %p129
        %p199 = pneg %p126
        %s200 = sand.u32 %s116, 1
        %s201 = scalar_lea.sflag [#allocation4], %s200
        %s202 = sand.u32 %s116, 1
        %s203 = smul.addr %s202, 16
        %s204 = scalar_lea.vmem [#allocation5], %s203
        %s205 = smul.u32 2, %s19
        %p206 = scmp.lt.s32.totalorder %s205, 3
        %s207 = scalar_select %p206, %s205, 3
        %s208 = smul.addr %s207, 4
        %s209 = scalar_lea.vmem %s0, %s208
        %s210 = smul.u32 2, %s19
        %s211 = smul.u32 2, %s19
        %v212 = vld [vmem:[#allocation2] sm:$0xff]
        %v213 = vld [vmem:[%s2] sm:$0xff]
        %v214 = vld [vmem:[%s3] sm:$0xff]
        %v215 = vld [vmem:[%s209] sm:$0xf]
        %s216 = scalar_lea.vmem %s209, 4
        %v217 = vld [vmem:[%s216] sm:$0xf]
        %219 = vrot.lane.b32.xlu0 %v215, 1
        %v220 = vpop.permute.xlu0 %219
        %223 = vrot.lane.b32.xlu0 %v217, 19
        %v224 = vpop.permute.xlu0 %223
        %vm226 = vcmask 7168
        %v227 = vsel %vm226, 0.0, %v220
        %vm228 = vcmask 138240
        %v229 = vsel %vm228, %v227, 0.0
        %vm230 = vcmask 154624
        %v231 = vsel %vm230, %v229, %v224
        %vm232 = vcmask 285696
        %v233 = vsel %vm232, %v231, 0.0
        %v235 = vrot.slane %v233, 4
        %236 = vrot.lane.b32.xlu0 %v235, 127
        %v237 = vpop.permute.xlu0 %236
        %239 = vrot.lane.b32.xlu0 %v233, 126
        %v240 = vpop.permute.xlu0 %239
        %vm241 = vcmask 1043456
        %v242 = vsel %vm241, %v233, %v237
        %vm243 = vcmask 97280
        %v245 = vsel %vm243, %v212, 0
        %v247 = vsel %vm241, %v240, 0
        %249 = vmatprep.subr.mxu0 0.0
        %250 = vmatpush1.msra.mxu0 %v242
        %251 = vmatprep.subr.mxu0 0.0
        %252 = vmatpush1.msra.mxu0 %v247
        %253 = vmatprep.subr.mxu0 0.0
        %254 = vmatpush1.msra.mxu0 0.0
        %255 = vmatprep.subr.mxu0 0.0
        %256 = vmatpush1.msra.mxu0 0.0
        %257 = vmatprep.subr.mxu0 0.0
        %258 = vmatpush1.msra.mxu0 0.0
        %259 = vmatprep.subr.mxu0 0.0
        %260 = vmatpush1.msra.mxu0 0.0
        %261 = vmatprep.subr.mxu0 0.0
        %262 = vmatpush1.msra.mxu0 0.0
        %263 = vmatprep.subr.mxu0 0.0
        %264 = vmatpush1.msra.mxu0 0.0
        %265 = vmatprep.subr.mxu0 0.0
        %266 = vmatpush1.msra.mxu0 0.0
        %267 = vmatprep.subr.mxu0 0.0
        %268 = vmatpush1.msra.mxu0 0.0
        %269 = vmatprep.subr.mxu0 0.0
        %270 = vmatpush1.msra.mxu0 0.0
        %271 = vmatprep.subr.mxu0 0.0
        %272 = vmatpush1.msra.mxu0 0.0
        %273 = vmatprep.subr.mxu0 0.0
        %274 = vmatpush1.msra.mxu0 0.0
        %275 = vmatprep.subr.mxu0 0.0
        %276 = vmatpush1.msra.mxu0 0.0
        %277 = vmatprep.subr.mxu0 0.0
        %278 = vmatpush1.msra.mxu0 0.0
        %279 = vmatprep.subr.mxu0 0.0
        %280 = vmatpush1.msra.mxu0 0.0
        %281 = vmatprep.subr.mxu0 0.0
        %282 = vmatpush1.msra.mxu0 0.0
        %283 = vmatprep.subr.mxu0 0.0
        %284 = vmatpush1.msra.mxu0 0.0
        %285 = vmatprep.subr.mxu0 0.0
        %286 = vmatpush1.msra.mxu0 0.0
        %287 = vmatprep.subr.mxu0 0.0
        %288 = vmatpush1.msra.mxu0 0.0
        %289 = vmatprep.subr.mxu0 0.0
        %290 = vmatpush1.msra.mxu0 0.0
        %291 = vmatprep.subr.mxu0 0.0
        %292 = vmatpush1.msra.mxu0 0.0
        %293 = vmatprep.subr.mxu0 0.0
        %294 = vmatpush1.msra.mxu0 0.0
        %295 = vmatprep.subr.mxu0 0.0
        %296 = vmatpush1.msra.mxu0 0.0
        %297 = vmatprep.subr.mxu0 0.0
        %298 = vmatpush1.msra.mxu0 0.0
        %299 = vmatprep.subr.mxu0 0.0
        %300 = vmatpush1.msra.mxu0 0.0
        %301 = vmatprep.subr.mxu0 0.0
        %302 = vmatpush1.msra.mxu0 0.0
        %303 = vmatprep.subr.mxu0 0.0
        %304 = vmatpush1.msra.mxu0 0.0
        %305 = vmatprep.subr.mxu0 0.0
        %306 = vmatpush1.msra.mxu0 0.0
        %307 = vmatprep.subr.mxu0 0.0
        %308 = vmatpush1.msra.mxu0 0.0
        %309 = vmatprep.subr.mxu0 0.0
        %310 = vmatpush1.msra.mxu0 0.0
        %311 = vmatprep.subr.mxu0 0.0
        %312 = vmatpush1.msra.mxu0 0.0
        %313 = vmatprep.mubr.f32.mxu0 0.0
        %314 = vmatmul.mubr.f32.gmra.mrb[0].mxu0 %v245
        %v315 = vpop.f32.mrb[0].mxu0
        %v316 = vadd.f32 0.0, %v315
        %v317 = vpop.f32.mrb[0].mxu0
        %318 = vdwg.mxu0
        %320 = vrot.lane.b32.xlu0 %v316, 126
        %v321 = vpop.permute.xlu0 %320
        %vm323 = vcmask 130048
        %v324 = vsel %vm323, %v316, %v321
        %vm325 = vcmask 261120
        %v326 = vsel %vm325, %v324, 0.0
        %v327 = vrot.slane %v326, 4
        %v328 = vadd.f32 %v326, %v327
        %v329 = vrot.slane %v328, 2
        %v330 = vadd.f32 %v328, %v329
        %v331 = vrot.slane %v330, 1
        %v332 = vadd.f32 %v330, %v331
        %v333 = vmul.f32 %v332, 0.125
        %v334 = vsub.f32 %v324, %v333
        %v335 = vmul.f32 %v334, %v334
        %v336 = vsel %vm325, %v335, 0.0
        %v337 = vrot.slane %v336, 4
        %v338 = vadd.f32 %v336, %v337
        %v339 = vrot.slane %v338, 2
        %v340 = vadd.f32 %v338, %v339
        %v341 = vrot.slane %v340, 1
        %v342 = vadd.f32 %v340, %v341
        %v343 = vmul.f32 %v342, 0.125
        %v344 = vadd.f32 %v343, 1e-05
        %v345 = vrsqrt.pop %v344
        %v346 = vmul.f32 %v334, %v345
        %348 = vset.pattern.permute.xlu0 0
        %349 = vperm.xlu0 %348, %v213
        %v350 = vpop.permute.xlu0 %349
        %v352 = vmul.f32 %v346, %v350
        %354 = vset.pattern.permute.xlu0 0
        %355 = vperm.xlu0 %354, %v214
        %v356 = vpop.permute.xlu0 %355
        %v358 = vadd.f32 %v352, %v356
        %v359 = vmul.f32 %v358, 0.5
        %v360 = vmul.f32 %v358, 0.70710677
        %v361 = verf.f32.pop %v360
        %v362 = vadd.f32 %v361, 1.0
        %v363 = vmul.f32 %v359, %v362
        %v364 = vlaneseq
        %v365 = vand.u32 %v364, 127
        %vm366 = vcmp.lt.s32.totalorder %v365, 0
        %v367 = vsub.s32 0, %v365
        %v368 = vsel %vm366, %v367, %v365
        %v369 = vshrl.u32 %v368, 1
        %v370 = vand.u32 %v368, 1
        %v371 = vsub.s32 0, %v370
        %v372 = vsel %vm366, %v371, %v370
        %vm373 = vcmp.ne.s32.totalorder %v372, 0
        %vm374 = vcmp.lt.s32.totalorder %v372, 0
        %vm375 = vmand %vm374, %vm373
        %v376 = vadd.s32 %v372, 2
        %v377 = vsel %vm375, %v376, %v372
        %vm378 = vcmp.lt.s32.totalorder %v377, 1
        %380 = vrot.lane.b32.xlu0 %v363, 127
        %v381 = vpop.permute.xlu0 %380
        %383 = vrot.lane.b32.xlu0 %v363, 31
        %v384 = vpop.permute.xlu0 %383
        %vm386 = vcmask 252928
        %v387 = vsel %vm386, %v381, %v384
        %v388 = vsel %vm378, 1, 0
        %vm389 = vcmp.eq.s32.totalorder %v388, 1
        %v390 = vsel %vm389, %v387, -inf
        %vm391 = vcmp.ge.s32.totalorder %v377, 1
        %392 = vrot.lane.b32.xlu0 %v363, 97
        %v393 = vpop.permute.xlu0 %392
        %395 = vrot.lane.b32.xlu0 %v363, 1
        %v396 = vpop.permute.xlu0 %395
        %v398 = vsel %vm226, %v393, %v396
        %v399 = vsel %vm391, 1, 0
        %vm400 = vcmp.eq.s32.totalorder %v399, 1
        %v401 = vsel %vm400, %v398, -inf
        %v402 = vmax.f32 %v390, %v401
        %v403 = vmax.f32 %v363, %v402
        %vm404 = vcmp.lt.s32.totalorder %v365, 0
        %v405 = vsub.s32 0, %v365
        %v406 = vsel %vm404, %v405, %v365
        %v407 = vshrl.u32 %v406, 4
        %v408 = vand.u32 %v406, 15
        %v409 = vsub.s32 0, %v408
        %v410 = vsel %vm404, %v409, %v408
        %vm411 = vcmp.ne.s32.totalorder %v410, 0
        %vm412 = vcmp.lt.s32.totalorder %v410, 0
        %vm413 = vmand %vm412, %vm411
        %v414 = vadd.s32 %v410, 16
        %v415 = vsel %vm413, %v414, %v410
        %vm416 = vcmp.ge.s32.totalorder %v415, 14
        %418 = vrot.lane.b32.xlu0 %v403, 126
        %v419 = vpop.permute.xlu0 %418
        %421 = vrot.lane.b32.xlu0 %v403, 30
        %v422 = vpop.permute.xlu0 %421
        %vm424 = vcmask 244736
        %v425 = vsel %vm424, %v419, %v422
        %v426 = vsel %vm416, 1, 0
        %vm427 = vcmp.eq.s32.totalorder %v426, 1
        %v428 = vsel %vm427, %v403, %v425
        %vm429 = vcmp.lt.s32.totalorder %v415, 2
        %430 = vrot.lane.b32.xlu0 %v403, 98
        %v431 = vpop.permute.xlu0 %430
        %433 = vrot.lane.b32.xlu0 %v403, 2
        %v434 = vpop.permute.xlu0 %433
        %vm436 = vcmask 15360
        %v437 = vsel %vm436, %v431, %v434
        %v438 = vsel %vm429, 1, 0
        %vm439 = vcmp.eq.s32.totalorder %v438, 1
        %v440 = vsel %vm439, %v403, %v437
        %v441 = vcvt.s32.f32 %v377
        %v442 = vmul.f32 %v441, 0.5
        %v443 = vadd.f32 %v442, -0.25
        %vm444 = vcmp.ge.f32.partialorder %v443, 0.0
        %v445 = vsub.f32 1.0, %v443
        %v446 = vadd.f32 %v443, 1.0
        %v447 = vsel %vm444, %v445, %v446
        %v448 = vsel %vm444, %v443, 0.0
        %v449 = vsub.f32 0.0, %v443
        %v450 = vsel %vm444, 0.0, %v449
        %v451 = vmul.f32 %v447, %v403
        %v452 = vmul.f32 %v448, %v428
        %v453 = vadd.f32 %v451, %v452
        %v454 = vmul.f32 %v450, %v440
        %v455 = vadd.f32 %v453, %v454
        %456 = vst.msk [vmem:[%s204] sm:$0xff] %vm323, %v455
        %458 = vrot.lane.b32.xlu0 %v455, 112
        %v459 = vpop.permute.xlu0 %458
        %s461 = scalar_lea.vmem %s204, 8 [#allocation5]
        %462 = vst.msk [vmem:[%s461] sm:$0xff] %vm323, %v459
        %s463 = sand.u32 %s116, 1
        %s464 = scalar_lea.sflag [#allocation4], %s463
        %s465 = sand.u32 %s116, 1
        %s466 = smul.addr %s465, 16
        %s467 = scalar_lea.vmem [#allocation5], %s466
        // Predicated region
        $region41: #{tpu_custom_call.1} parent=35 // pred_check
          %p468 = pneg %p126
        $region42: #{tpu_custom_call.1} parent=35 // pred_check_branch
          %470 = sbr.rel (%p468) target = $region44
        $region43: #{tpu_custom_call.1} parent=35 // pred_region
          %s471 = smul.u32 2, %s19
          %s473 = ssub.s32 256, 256
          %474 = vsyncadd %s464, %s473
          %s475 = smul.addr %s471, 128
          %s476 = scalar_lea.hbm %s4, %s475
          %s477 = sshll.u32 %s467, 4
          %s478 = int_to_ptr.vmem [resolvable:$true] %s477
          %483 = dma.vmem_to_hbm [thread:$0]  %s478, 256, %s476, %s464, 128, 128, 8
        $region44: #{tpu_custom_call.1} parent=35 // pred_fallthru
          _
      $region36: #{tpu_custom_call.1} parent=5 // pred_fallthru
        _
      %p484 = scmp.le.s32.totalorder 2, %s14
      // Predicated region
      $region45: #{tpu_custom_call.1} parent=5 // pred_check
        %p485 = pneg %p484
      $region46: #{tpu_custom_call.1} parent=5 // pred_check_branch
        %487 = sbr.rel (%p485) target = $region48
      $region47: #{tpu_custom_call.1} parent=5 // pred_region
        %s488 = ssub.s32 %s14, 2
        // Predicated region
        $region49: #{tpu_custom_call.1} parent=47 // pred_check
          %p489 = pneg %p132
        $region50: #{tpu_custom_call.1} parent=47 // pred_check_branch
          %491 = sbr.rel (%p489) target = $region52
        $region51: #{tpu_custom_call.1} parent=47 // pred_region
          %s492 = sand.u32 %s117, 1
          %s493 = scalar_lea.sflag [#allocation4], %s492
          %s494 = sand.u32 %s117, 1
          %s495 = smul.addr %s494, 16
          %s496 = scalar_lea.vmem [#allocation5], %s495
          %497 = dma.done %s493, 256
        $region52: #{tpu_custom_call.1} parent=47 // pred_fallthru
          _
      $region48: #{tpu_custom_call.1} parent=5 // pred_fallthru
        _
    $region6: #{tpu_custom_call.1} parent=1 // loop_footer
      %s18 = sadd.s32 1, %s14
    $region7: #{tpu_custom_call.1} parent=1 // loop_footer_branch
      %13 = sbr.rel target = $region3
    $region8: #{tpu_custom_call.1} parent=1 // loop_exit
      _
    %498 = vsyncpa [#allocation3], 1
    %s499 = scalar_lea.sflag [#allocation3], 1
    %500 = vsyncpa %s499, 1
    %501 = vsyncpa [#allocation4], 1
    %s502 = scalar_lea.sflag [#allocation4], 1
    %503 = vsyncpa %s502, 1

</llo_original>
